<compile_context>
chip_gen: v7x
topology: tpu7x:2x2x1
jax: 0.10.0
libtpu: 0.0.40
codegen_flags: <defaults>
</compile_context>

<pallas_src>
import functools

import jax
import jax.numpy as jnp
from jax.experimental import pallas as pl
from jax.experimental.pallas import tpu as pltpu

EPS = 1e-5


# ----------------------------------------------------------------------------
# Fused Pallas kernel: conv1+BN1+ReLU+conv2+BN2+residual, all in VMEM
# ----------------------------------------------------------------------------
def _basic_residual_unit_kernel(x_ref, w1_ref, s1_ref, b1_ref,
                                w2_ref, s2_ref, b2_ref, o_ref, xpad_ref, *, K):
    """One batch-block of the residual unit.

    x_ref:            (BB, L, C)       channels-last input block
    w{1,2}_ref:       (K*C, C)         im2col conv weights
    s/b{1,2}_ref:     (1, C)           folded BatchNorm scale / shift (incl. conv bias)
    o_ref:            (BB, L, C)       output block
    xpad_ref:         (BB, L+K-1, C)   VMEM scratch for zero 'same' padding
    """
    BB, L, C = x_ref.shape
    pad = (K - 1) // 2

    # Zero once per grid step; only the interior is overwritten below, so the
    # pad rows stay zero for both convolutions.
    xpad_ref[...] = jnp.zeros_like(xpad_ref)

    def conv_bn(inp, w_ref, s_ref, b_ref):
        # 'same' zero padding via the VMEM scratch.
        xpad_ref[:, pad:pad + L, :] = inp
        xp = xpad_ref[...]                                      # (BB, L+K-1, C)
        # im2col: K shifted slices stacked on the lane axis -> one MXU matmul
        # with contraction depth K*C and batch folded into the rows.
        patches = jnp.concatenate([xp[:, k:k + L, :] for k in range(K)], axis=-1)
        patches = patches.reshape(BB * L, K * C)
        y = jnp.dot(patches, w_ref[...], preferred_element_type=jnp.float32)
        y = y * s_ref[...] + b_ref[...]                         # folded BN (+ bias)
        return y.reshape(BB, L, C)

    x = x_ref[...].astype(jnp.float32)
    h = jnp.maximum(conv_bn(x, w1_ref, s1_ref, b1_ref), 0.0)    # conv1 + bn1 + relu1
    y = conv_bn(h, w2_ref, s2_ref, b2_ref)                      # conv2 + bn2 (no relu)
    o_ref[...] = (y + x).astype(o_ref.dtype)                    # residual add


# ----------------------------------------------------------------------------
# Wrapper: NCL <-> NLC at the boundary, single fused pallas_call
# ----------------------------------------------------------------------------
def basic_residual_unit(x_ncl, params, *, block_batch=1):
    """x_ncl: (B, C, L) torch-layout input. Returns (B, C, L)."""
    B, C, L = x_ncl.shape
    w1, s1, b1 = params["conv1"]
    w2, s2, b2 = params["conv2"]
    K = w1.shape[0] // C
    pad = (K - 1) // 2

    BB = block_batch
    assert B % BB == 0, (B, BB)
    nb = B // BB

    x_nlc = jnp.transpose(x_ncl, (0, 2, 1))                     # (B, L, C)

    kernel = functools.partial(_basic_residual_unit_kernel, K=K)
    y_nlc = pl.pallas_call(
        kernel,
        out_shape=jax.ShapeDtypeStruct((B, L, C), jnp.float32),
        grid=(nb,),
        in_specs=[
            pl.BlockSpec((BB, L, C), lambda b: (b, 0, 0)),
            pl.BlockSpec((K * C, C), lambda b: (0, 0)),
            pl.BlockSpec((1, C), lambda b: (0, 0)),
            pl.BlockSpec((1, C), lambda b: (0, 0)),
            pl.BlockSpec((K * C, C), lambda b: (0, 0)),
            pl.BlockSpec((1, C), lambda b: (0, 0)),
            pl.BlockSpec((1, C), lambda b: (0, 0)),
        ],
        out_specs=pl.BlockSpec((BB, L, C), lambda b: (b, 0, 0)),
        scratch_shapes=[pltpu.VMEM((BB, L + 2 * pad, C), jnp.float32)],
        compiler_params=pltpu.CompilerParams(
            dimension_semantics=("parallel",)),                 # lets v7x use both TCs
    )(x_nlc, w1, s1, b1, w2, s2, b2)

    return jnp.transpose(y_nlc, (0, 2, 1))                      # back to (B, C, L)


# ----------------------------------------------------------------------------
# Deterministic parameters (torch layouts) + folding for the kernel
# ----------------------------------------------------------------------------
def make_unit_params(key, channels, k=5):
    """Raw torch-style parameters for conv1/bn1 and conv2/bn2."""
    raw = {}
    for i, kk in enumerate(jax.random.split(key, 2)):
        kw, kb, k1, k2, k3, k4 = jax.random.split(kk, 6)
        fan_in = channels * k
        bound = 1.0 / (fan_in ** 0.5)
        raw[f"conv{i + 1}"] = dict(
            w=jax.random.uniform(kw, (channels, channels, k), jnp.float32, -bound, bound),
            b=jax.random.uniform(kb, (channels,), jnp.float32, -bound, bound),
            gamma=jax.random.uniform(k1, (channels,), jnp.float32, 0.5, 1.5),
            beta=0.1 * jax.random.normal(k2, (channels,), jnp.float32),
            mean=0.1 * jax.random.normal(k3, (channels,), jnp.float32),
            var=jax.random.uniform(k4, (channels,), jnp.float32, 0.5, 1.5),
        )
    return raw


def fold_params(raw):
    """Fold eval-mode BN (+ conv bias) and reshape conv weights to im2col layout."""
    folded = {}
    for name, p in raw.items():
        cout, cin, k = p["w"].shape
        scale = p["gamma"] / jnp.sqrt(p["var"] + EPS)
        shift = p["beta"] - p["mean"] * scale + p["b"] * scale
        # torch (Cout, Cin, K) -> (K, Cin, Cout) -> (K*Cin, Cout), matching the
        # tap-major concat order used inside the kernel.
        w_im2col = jnp.transpose(p["w"], (2, 1, 0)).reshape(k * cin, cout)
        folded[name] = (w_im2col, scale.reshape(1, cout), shift.reshape(1, cout))
    return folded


# ----------------------------------------------------------------------------
# Pure-JAX reference (matches the torch forward, eval-mode BN)
# ----------------------------------------------------------------------------
def reference_forward(raw, x_ncl):
    def conv_bn(x, p):
        y = jax.lax.conv_general_dilated(
            x, p["w"], window_strides=(1,), padding=[(2, 2)],
            dimension_numbers=("NCH", "OIH", "NCH"))
        y = y + p["b"][None, :, None]
        scale = p["gamma"] / jnp.sqrt(p["var"] + EPS)
        shift = p["beta"] - p["mean"] * scale
        return y * scale[None, :, None] + shift[None, :, None]

    h = jnp.maximum(conv_bn(x_ncl, raw["conv1"]), 0.0)
    y = conv_bn(h, raw["conv2"])
    return y + x_ncl


# ----------------------------------------------------------------------------
if __name__ == "__main__":
    B, C, L = 2, 16, 32            # batch, channels (in == out for residual), length
    key = jax.random.PRNGKey(0)
    kp, kx = jax.random.split(key)

    raw = make_unit_params(kp, C, 5)
    params = fold_params(raw)
    x = jax.random.normal(kx, (B, C, L), jnp.float32)

    fwd = jax.jit(basic_residual_unit)
    y = fwd(x, params)
    jax.block_until_ready(y)

    assert y.shape == (B, C, L), y.shape
    assert bool(jnp.all(jnp.isfinite(y)))

    y_ref = reference_forward(raw, x)
    err = float(jnp.max(jnp.abs(y - y_ref)))
    assert jnp.allclose(y, y_ref, rtol=2e-4, atol=2e-4), err

    print("KERNEL_OK")
</pallas_src>

<mosaic_0001>
module attributes {stable_mosaic.version = 11 : i64} {
  func.func @_basic_residual_unit_kernel(%arg0: i32, %arg1: memref<1x32x16xf32, #tpu.memory_space<vmem>>, %arg2: memref<80x16xf32, #tpu.memory_space<vmem>>, %arg3: memref<1x16xf32, #tpu.memory_space<vmem>>, %arg4: memref<1x16xf32, #tpu.memory_space<vmem>>, %arg5: memref<80x16xf32, #tpu.memory_space<vmem>>, %arg6: memref<1x16xf32, #tpu.memory_space<vmem>>, %arg7: memref<1x16xf32, #tpu.memory_space<vmem>>, %arg8: memref<1x32x16xf32, #tpu.memory_space<vmem>>, %arg9: memref<1x36x16xf32, #tpu.memory_space<vmem>>) attributes {dimension_semantics = [#tpu.dimension_semantics<parallel>], iteration_bounds = array<i64: 2>, scalar_prefetch = 0 : i64, scratch_operands = 1 : i64, tpu.core_type = #tpu.core_type<tc>, window_params = [{transform_indices = @transform_0, window_bounds = array<i64: 1, 32, 16>}, {pipeline_mode = #tpu.pipeline_mode<synchronous>, transform_indices = @transform_1, window_bounds = array<i64: 80, 16>}, {pipeline_mode = #tpu.pipeline_mode<synchronous>, transform_indices = @transform_2, window_bounds = array<i64: 1, 16>}, {pipeline_mode = #tpu.pipeline_mode<synchronous>, transform_indices = @transform_3, window_bounds = array<i64: 1, 16>}, {pipeline_mode = #tpu.pipeline_mode<synchronous>, transform_indices = @transform_4, window_bounds = array<i64: 80, 16>}, {pipeline_mode = #tpu.pipeline_mode<synchronous>, transform_indices = @transform_5, window_bounds = array<i64: 1, 16>}, {pipeline_mode = #tpu.pipeline_mode<synchronous>, transform_indices = @transform_6, window_bounds = array<i64: 1, 16>}, {transform_indices = @transform_7, window_bounds = array<i64: 1, 32, 16>}]} {
    %cst = arith.constant 0.000000e+00 : f32
    %0 = vector.broadcast %cst : f32 to vector<1x36x16xf32>
    %c0 = arith.constant 0 : index
    %c0_0 = arith.constant 0 : index
    %c0_1 = arith.constant 0 : index
    %1 = vector.load %arg9[%c0, %c0_0, %c0_1] : memref<1x36x16xf32, #tpu.memory_space<vmem>>, vector<1x36x16xf32>
    tpu.vector_store %arg9[%c0, %c0_0, %c0_1], %0 {strides = array<i32>} : memref<1x36x16xf32, #tpu.memory_space<vmem>>, vector<1x36x16xf32>,
    %c0_2 = arith.constant 0 : index
    %c0_3 = arith.constant 0 : index
    %c0_4 = arith.constant 0 : index
    %2 = vector.load %arg1[%c0_2, %c0_3, %c0_4] : memref<1x32x16xf32, #tpu.memory_space<vmem>>, vector<1x32x16xf32>
    %c0_5 = arith.constant 0 : index
    %c2 = arith.constant 2 : index
    %c0_6 = arith.constant 0 : index
    %3 = vector.load %arg9[%c0_5, %c2, %c0_6] : memref<1x36x16xf32, #tpu.memory_space<vmem>>, vector<1x32x16xf32>
    tpu.vector_store %arg9[%c0_5, %c2, %c0_6], %2 {strides = array<i32>} : memref<1x36x16xf32, #tpu.memory_space<vmem>>, vector<1x32x16xf32>,
    %c0_7 = arith.constant 0 : index
    %c0_8 = arith.constant 0 : index
    %c0_9 = arith.constant 0 : index
    %4 = vector.load %arg9[%c0_7, %c0_8, %c0_9] : memref<1x36x16xf32, #tpu.memory_space<vmem>>, vector<1x36x16xf32>
    %5 = vector.extract_strided_slice %4 {offsets = [0, 0, 0], sizes = [1, 32, 16], strides = [1, 1, 1]} : vector<1x36x16xf32> to vector<1x32x16xf32>
    %6 = vector.extract_strided_slice %4 {offsets = [0, 1, 0], sizes = [1, 32, 16], strides = [1, 1, 1]} : vector<1x36x16xf32> to vector<1x32x16xf32>
    %7 = vector.extract_strided_slice %4 {offsets = [0, 2, 0], sizes = [1, 32, 16], strides = [1, 1, 1]} : vector<1x36x16xf32> to vector<1x32x16xf32>
    %8 = vector.extract_strided_slice %4 {offsets = [0, 3, 0], sizes = [1, 32, 16], strides = [1, 1, 1]} : vector<1x36x16xf32> to vector<1x32x16xf32>
    %9 = vector.extract_strided_slice %4 {offsets = [0, 4, 0], sizes = [1, 32, 16], strides = [1, 1, 1]} : vector<1x36x16xf32> to vector<1x32x16xf32>
    %10 = tpu.concatenate %5, %6, %7, %8, %9 in 2 : vector<1x32x16xf32>, vector<1x32x16xf32>, vector<1x32x16xf32>, vector<1x32x16xf32>, vector<1x32x16xf32> -> vector<1x32x80xf32>
    %11 = vector.shape_cast %10 : vector<1x32x80xf32> to vector<32x80xf32>
    %c0_10 = arith.constant 0 : index
    %c0_11 = arith.constant 0 : index
    %12 = vector.load %arg2[%c0_10, %c0_11] : memref<80x16xf32, #tpu.memory_space<vmem>>, vector<80x16xf32>
    %cst_12 = arith.constant dense<0.000000e+00> : vector<32x16xf32>
    %13 = tpu.matmul %11, %12, %cst_12 {dimension_numbers = #tpu.dot_dimension_numbers<[1], [0], [0], [1], [0, 0, 1, 1], [], []>} : vector<32x80xf32>, vector<80x16xf32>, vector<32x16xf32> -> vector<32x16xf32>
    %c0_13 = arith.constant 0 : index
    %c0_14 = arith.constant 0 : index
    %14 = vector.load %arg3[%c0_13, %c0_14] : memref<1x16xf32, #tpu.memory_space<vmem>>, vector<1x16xf32>
    %15 = vector.broadcast %14 : vector<1x16xf32> to vector<32x16xf32>
    %16 = arith.mulf %13, %15 : vector<32x16xf32>
    %c0_15 = arith.constant 0 : index
    %c0_16 = arith.constant 0 : index
    %17 = vector.load %arg4[%c0_15, %c0_16] : memref<1x16xf32, #tpu.memory_space<vmem>>, vector<1x16xf32>
    %18 = vector.broadcast %17 : vector<1x16xf32> to vector<32x16xf32>
    %19 = arith.addf %16, %18 : vector<32x16xf32>
    %20 = vector.shape_cast %19 : vector<32x16xf32> to vector<1x32x16xf32>
    %cst_17 = arith.constant 0.000000e+00 : f32
    %21 = vector.broadcast %cst_17 : f32 to vector<1x32x16xf32>
    %22 = arith.maximumf %20, %21 : vector<1x32x16xf32>
    %c0_18 = arith.constant 0 : index
    %c2_19 = arith.constant 2 : index
    %c0_20 = arith.constant 0 : index
    %23 = vector.load %arg9[%c0_18, %c2_19, %c0_20] : memref<1x36x16xf32, #tpu.memory_space<vmem>>, vector<1x32x16xf32>
    tpu.vector_store %arg9[%c0_18, %c2_19, %c0_20], %22 {strides = array<i32>} : memref<1x36x16xf32, #tpu.memory_space<vmem>>, vector<1x32x16xf32>,
    %c0_21 = arith.constant 0 : index
    %c0_22 = arith.constant 0 : index
    %c0_23 = arith.constant 0 : index
    %24 = vector.load %arg9[%c0_21, %c0_22, %c0_23] : memref<1x36x16xf32, #tpu.memory_space<vmem>>, vector<1x36x16xf32>
    %25 = vector.extract_strided_slice %24 {offsets = [0, 0, 0], sizes = [1, 32, 16], strides = [1, 1, 1]} : vector<1x36x16xf32> to vector<1x32x16xf32>
    %26 = vector.extract_strided_slice %24 {offsets = [0, 1, 0], sizes = [1, 32, 16], strides = [1, 1, 1]} : vector<1x36x16xf32> to vector<1x32x16xf32>
    %27 = vector.extract_strided_slice %24 {offsets = [0, 2, 0], sizes = [1, 32, 16], strides = [1, 1, 1]} : vector<1x36x16xf32> to vector<1x32x16xf32>
    %28 = vector.extract_strided_slice %24 {offsets = [0, 3, 0], sizes = [1, 32, 16], strides = [1, 1, 1]} : vector<1x36x16xf32> to vector<1x32x16xf32>
    %29 = vector.extract_strided_slice %24 {offsets = [0, 4, 0], sizes = [1, 32, 16], strides = [1, 1, 1]} : vector<1x36x16xf32> to vector<1x32x16xf32>
    %30 = tpu.concatenate %25, %26, %27, %28, %29 in 2 : vector<1x32x16xf32>, vector<1x32x16xf32>, vector<1x32x16xf32>, vector<1x32x16xf32>, vector<1x32x16xf32> -> vector<1x32x80xf32>
    %31 = vector.shape_cast %30 : vector<1x32x80xf32> to vector<32x80xf32>
    %c0_24 = arith.constant 0 : index
    %c0_25 = arith.constant 0 : index
    %32 = vector.load %arg5[%c0_24, %c0_25] : memref<80x16xf32, #tpu.memory_space<vmem>>, vector<80x16xf32>
    %cst_26 = arith.constant dense<0.000000e+00> : vector<32x16xf32>
    %33 = tpu.matmul %31, %32, %cst_26 {dimension_numbers = #tpu.dot_dimension_numbers<[1], [0], [0], [1], [0, 0, 1, 1], [], []>} : vector<32x80xf32>, vector<80x16xf32>, vector<32x16xf32> -> vector<32x16xf32>
    %c0_27 = arith.constant 0 : index
    %c0_28 = arith.constant 0 : index
    %34 = vector.load %arg6[%c0_27, %c0_28] : memref<1x16xf32, #tpu.memory_space<vmem>>, vector<1x16xf32>
    %35 = vector.broadcast %34 : vector<1x16xf32> to vector<32x16xf32>
    %36 = arith.mulf %33, %35 : vector<32x16xf32>
    %c0_29 = arith.constant 0 : index
    %c0_30 = arith.constant 0 : index
    %37 = vector.load %arg7[%c0_29, %c0_30] : memref<1x16xf32, #tpu.memory_space<vmem>>, vector<1x16xf32>
    %38 = vector.broadcast %37 : vector<1x16xf32> to vector<32x16xf32>
    %39 = arith.addf %36, %38 : vector<32x16xf32>
    %40 = vector.shape_cast %39 : vector<32x16xf32> to vector<1x32x16xf32>
    %41 = arith.addf %40, %2 : vector<1x32x16xf32>
    %c0_31 = arith.constant 0 : index
    %c0_32 = arith.constant 0 : index
    %c0_33 = arith.constant 0 : index
    %42 = vector.load %arg8[%c0_31, %c0_32, %c0_33] : memref<1x32x16xf32, #tpu.memory_space<vmem>>, vector<1x32x16xf32>
    tpu.vector_store %arg8[%c0_31, %c0_32, %c0_33], %41 {strides = array<i32>} : memref<1x32x16xf32, #tpu.memory_space<vmem>>, vector<1x32x16xf32>,
    return
  }
  func.func @transform_0(%arg0: i32) -> (i32, i32, i32) {
    %c0_i32 = arith.constant 0 : i32
    %c0_i32_0 = arith.constant 0 : i32
    %c0_i32_1 = arith.constant 0 : i32
    return %arg0, %c0_i32, %c0_i32_0 : i32, i32, i32
  }
  func.func @transform_1(%arg0: i32) -> (i32, i32) {
    %c0_i32 = arith.constant 0 : i32
    %c0_i32_0 = arith.constant 0 : i32
    %c0_i32_1 = arith.constant 0 : i32
    return %c0_i32, %c0_i32_0 : i32, i32
  }
  func.func @transform_2(%arg0: i32) -> (i32, i32) {
    %c0_i32 = arith.constant 0 : i32
    %c0_i32_0 = arith.constant 0 : i32
    %c0_i32_1 = arith.constant 0 : i32
    return %c0_i32, %c0_i32_0 : i32, i32
  }
  func.func @transform_3(%arg0: i32) -> (i32, i32) {
    %c0_i32 = arith.constant 0 : i32
    %c0_i32_0 = arith.constant 0 : i32
    %c0_i32_1 = arith.constant 0 : i32
    return %c0_i32, %c0_i32_0 : i32, i32
  }
  func.func @transform_4(%arg0: i32) -> (i32, i32) {
    %c0_i32 = arith.constant 0 : i32
    %c0_i32_0 = arith.constant 0 : i32
    %c0_i32_1 = arith.constant 0 : i32
    return %c0_i32, %c0_i32_0 : i32, i32
  }
  func.func @transform_5(%arg0: i32) -> (i32, i32) {
    %c0_i32 = arith.constant 0 : i32
    %c0_i32_0 = arith.constant 0 : i32
    %c0_i32_1 = arith.constant 0 : i32
    return %c0_i32, %c0_i32_0 : i32, i32
  }
  func.func @transform_6(%arg0: i32) -> (i32, i32) {
    %c0_i32 = arith.constant 0 : i32
    %c0_i32_0 = arith.constant 0 : i32
    %c0_i32_1 = arith.constant 0 : i32
    return %c0_i32, %c0_i32_0 : i32, i32
  }
  func.func @transform_7(%arg0: i32) -> (i32, i32, i32) {
    %c0_i32 = arith.constant 0 : i32
    %c0_i32_0 = arith.constant 0 : i32
    %c0_i32_1 = arith.constant 0 : i32
    return %arg0, %c0_i32, %c0_i32_0 : i32, i32, i32
  }
}

</mosaic_0001>

<llo_original>
// kernel: basic_residual_unit.1
$region0: #{basic_residual_unit.1}
  #allocation0 [shape = 'u32[]', space=smem, size = 0x4, offset = 0x4, fixed_abs, tag = 'smem constant byte address 0x4 - core index']
  #allocation1 [shape = 'u32[144,128]{1,0:T(1,128)}', space=vmem, size = 0x12000, scoped, tag = 'internal scratch']
  #allocation2 [shape = 'f32[1,36,16]{2,1,0:T(8,128)}', space=vmem, size = 0x5000, scoped, tag = 'scratch operand']
  %s0 = inlined_call_operand.vmem [shape: f32[2,32,16], index: 0, kind: input, shape index: {}]
  %s1 = inlined_call_operand.vmem [shape: f32[80,16], index: 1, kind: input, shape index: {}]
  %s2 = inlined_call_operand.vmem [shape: f32[1,16], index: 2, kind: input, shape index: {}]
  %s3 = inlined_call_operand.vmem [shape: f32[1,16], index: 3, kind: input, shape index: {}]
  %s4 = inlined_call_operand.vmem [shape: f32[80,16], index: 4, kind: input, shape index: {}]
  %s5 = inlined_call_operand.vmem [shape: f32[1,16], index: 5, kind: input, shape index: {}]
  %s6 = inlined_call_operand.vmem [shape: f32[1,16], index: 6, kind: input, shape index: {}]
  %s7 = inlined_call_operand.vmem [shape: f32[2,32,16], index: 7, kind: output, shape index: {}]
  %s8 = sld [smem:[#allocation0]]
  $region61: #{basic_residual_unit.1} parent=0
    _
  %s10 = ssub.s32 1, %s8
  %s11 = scalar_select 0, %s10, %s8
  loop: start=0, step=1, limit=4
  $region2: #{basic_residual_unit.1} parent=0 // loop_pre_header
    _
  $region3: #{basic_residual_unit.1} parent=0 // loop_header
    %s13 = sphi 0, %s17
    %p14 = scmp.ge.s32.totalorder %s13, 4
    %s23 = sphi 0, %s25
    %s26 = sphi 0, %s23
    %s27 = sphi 0, %s26
    %s43 = sphi 0, %s27
    %s47 = sphi 0, %s47
    %s49 = sphi 0, %s47
    %s50 = sphi 0, %s49
    %s64 = sphi 0, %s50
    %s68 = sphi 0, %s68
    %s70 = sphi 0, %s68
    %s71 = sphi 0, %s70
    %s85 = sphi 0, %s71
    %s89 = sphi 0, %s89
    %s91 = sphi 0, %s89
    %s92 = sphi 0, %s91
    %s106 = sphi 0, %s92
    %s110 = sphi 0, %s110
    %s112 = sphi 0, %s110
    %s113 = sphi 0, %s112
    %s127 = sphi 0, %s113
    %s131 = sphi 0, %s131
    %s133 = sphi 0, %s131
    %s134 = sphi 0, %s133
    %s148 = sphi 0, %s134
    %s152 = sphi 0, %s152
    %s154 = sphi 0, %s152
    %s155 = sphi 0, %s154
    %s169 = sphi 0, %s155
    %s175 = sphi 0, %s177
    %s178 = sphi 0, %s175
    %s179 = sphi 0, %s178
    %s195 = sphi 0, %s179
  $region4: #{basic_residual_unit.1} parent=0 // loop_header_branch
    %16 = sbr.rel (%p14) target = $region8
  $region5: #{basic_residual_unit.1} parent=0 // loop_body
    %s18 = ssub.s32 %s13, 1
    %s19 = ssub.s32 %s13, 2
    %s20 = sadd.s32 %s13, 1
    %s21 = ssub.s32 %s13, %s20
    %p22 = scmp.eq.s32.totalorder %s21, 0
    %s24 = sadd.s32 %s23, 1
    %s25 = scalar_select %p22, %s23, %s24
    %p28 = pneg %p22
    %p29 = scmp.eq.s32.totalorder %s13, 1
    %p30 = por %p28, %p29
    %p31 = scmp.ne.s32.totalorder %s23, %s26
    %p32 = scmp.eq.s32.totalorder %s13, 0
    %p33 = por %p31, %p32
    %p34 = scmp.ne.s32.totalorder %s23, %s26
    %p35 = scmp.eq.s32.totalorder %s18, 1
    %p36 = por %p34, %p35
    %p37 = scmp.ne.s32.totalorder %s26, %s27
    %p38 = scmp.eq.s32.totalorder %s18, 0
    %p39 = por %p37, %p38
    %p40 = scmp.ne.s32.totalorder %s26, %s27
    %p41 = scmp.eq.s32.totalorder %s19, 1
    %p42 = por %p40, %p41
    %p44 = scmp.ne.s32.totalorder %s27, %s43
    %p45 = scmp.eq.s32.totalorder %s19, 0
    %p46 = por %p44, %p45
    %s48 = sadd.s32 %s47, 1
    %p51 = scmp.eq.s32.totalorder %s13, 1
    %p52 = scmp.ne.s32.totalorder %s47, %s49
    %p53 = scmp.eq.s32.totalorder %s13, 0
    %p54 = por %p52, %p53
    %p55 = scmp.ne.s32.totalorder %s47, %s49
    %p56 = scmp.eq.s32.totalorder %s18, 1
    %p57 = por %p55, %p56
    %p58 = scmp.ne.s32.totalorder %s49, %s50
    %p59 = scmp.eq.s32.totalorder %s18, 0
    %p60 = por %p58, %p59
    %p61 = scmp.ne.s32.totalorder %s49, %s50
    %p62 = scmp.eq.s32.totalorder %s19, 1
    %p63 = por %p61, %p62
    %p65 = scmp.ne.s32.totalorder %s50, %s64
    %p66 = scmp.eq.s32.totalorder %s19, 0
    %p67 = por %p65, %p66
    %s69 = sadd.s32 %s68, 1
    %p72 = scmp.eq.s32.totalorder %s13, 1
    %p73 = scmp.ne.s32.totalorder %s68, %s70
    %p74 = scmp.eq.s32.totalorder %s13, 0
    %p75 = por %p73, %p74
    %p76 = scmp.ne.s32.totalorder %s68, %s70
    %p77 = scmp.eq.s32.totalorder %s18, 1
    %p78 = por %p76, %p77
    %p79 = scmp.ne.s32.totalorder %s70, %s71
    %p80 = scmp.eq.s32.totalorder %s18, 0
    %p81 = por %p79, %p80
    %p82 = scmp.ne.s32.totalorder %s70, %s71
    %p83 = scmp.eq.s32.totalorder %s19, 1
    %p84 = por %p82, %p83
    %p86 = scmp.ne.s32.totalorder %s71, %s85
    %p87 = scmp.eq.s32.totalorder %s19, 0
    %p88 = por %p86, %p87
    %s90 = sadd.s32 %s89, 1
    %p93 = scmp.eq.s32.totalorder %s13, 1
    %p94 = scmp.ne.s32.totalorder %s89, %s91
    %p95 = scmp.eq.s32.totalorder %s13, 0
    %p96 = por %p94, %p95
    %p97 = scmp.ne.s32.totalorder %s89, %s91
    %p98 = scmp.eq.s32.totalorder %s18, 1
    %p99 = por %p97, %p98
    %p100 = scmp.ne.s32.totalorder %s91, %s92
    %p101 = scmp.eq.s32.totalorder %s18, 0
    %p102 = por %p100, %p101
    %p103 = scmp.ne.s32.totalorder %s91, %s92
    %p104 = scmp.eq.s32.totalorder %s19, 1
    %p105 = por %p103, %p104
    %p107 = scmp.ne.s32.totalorder %s92, %s106
    %p108 = scmp.eq.s32.totalorder %s19, 0
    %p109 = por %p107, %p108
    %s111 = sadd.s32 %s110, 1
    %p114 = scmp.eq.s32.totalorder %s13, 1
    %p115 = scmp.ne.s32.totalorder %s110, %s112
    %p116 = scmp.eq.s32.totalorder %s13, 0
    %p117 = por %p115, %p116
    %p118 = scmp.ne.s32.totalorder %s110, %s112
    %p119 = scmp.eq.s32.totalorder %s18, 1
    %p120 = por %p118, %p119
    %p121 = scmp.ne.s32.totalorder %s112, %s113
    %p122 = scmp.eq.s32.totalorder %s18, 0
    %p123 = por %p121, %p122
    %p124 = scmp.ne.s32.totalorder %s112, %s113
    %p125 = scmp.eq.s32.totalorder %s19, 1
    %p126 = por %p124, %p125
    %p128 = scmp.ne.s32.totalorder %s113, %s127
    %p129 = scmp.eq.s32.totalorder %s19, 0
    %p130 = por %p128, %p129
    %s132 = sadd.s32 %s131, 1
    %p135 = scmp.eq.s32.totalorder %s13, 1
    %p136 = scmp.ne.s32.totalorder %s131, %s133
    %p137 = scmp.eq.s32.totalorder %s13, 0
    %p138 = por %p136, %p137
    %p139 = scmp.ne.s32.totalorder %s131, %s133
    %p140 = scmp.eq.s32.totalorder %s18, 1
    %p141 = por %p139, %p140
    %p142 = scmp.ne.s32.totalorder %s133, %s134
    %p143 = scmp.eq.s32.totalorder %s18, 0
    %p144 = por %p142, %p143
    %p145 = scmp.ne.s32.totalorder %s133, %s134
    %p146 = scmp.eq.s32.totalorder %s19, 1
    %p147 = por %p145, %p146
    %p149 = scmp.ne.s32.totalorder %s134, %s148
    %p150 = scmp.eq.s32.totalorder %s19, 0
    %p151 = por %p149, %p150
    %s153 = sadd.s32 %s152, 1
    %p156 = scmp.eq.s32.totalorder %s13, 1
    %p157 = scmp.ne.s32.totalorder %s152, %s154
    %p158 = scmp.eq.s32.totalorder %s13, 0
    %p159 = por %p157, %p158
    %p160 = scmp.ne.s32.totalorder %s152, %s154
    %p161 = scmp.eq.s32.totalorder %s18, 1
    %p162 = por %p160, %p161
    %p163 = scmp.ne.s32.totalorder %s154, %s155
    %p164 = scmp.eq.s32.totalorder %s18, 0
    %p165 = por %p163, %p164
    %p166 = scmp.ne.s32.totalorder %s154, %s155
    %p167 = scmp.eq.s32.totalorder %s19, 1
    %p168 = por %p166, %p167
    %p170 = scmp.ne.s32.totalorder %s155, %s169
    %p171 = scmp.eq.s32.totalorder %s19, 0
    %p172 = por %p170, %p171
    %s173 = ssub.s32 %s13, %s20
    %p174 = scmp.eq.s32.totalorder %s173, 0
    %s176 = sadd.s32 %s175, 1
    %s177 = scalar_select %p174, %s175, %s176
    %p180 = pneg %p174
    %p181 = scmp.eq.s32.totalorder %s13, 1
    %p182 = por %p180, %p181
    %p183 = scmp.ne.s32.totalorder %s175, %s178
    %p184 = scmp.eq.s32.totalorder %s13, 0
    %p185 = por %p183, %p184
    %p186 = scmp.ne.s32.totalorder %s175, %s178
    %p187 = scmp.eq.s32.totalorder %s18, 1
    %p188 = por %p186, %p187
    %p189 = scmp.ne.s32.totalorder %s178, %s179
    %p190 = scmp.eq.s32.totalorder %s18, 0
    %p191 = por %p189, %p190
    %p192 = scmp.ne.s32.totalorder %s178, %s179
    %p193 = scmp.eq.s32.totalorder %s19, 1
    %p194 = por %p192, %p193
    %p196 = scmp.ne.s32.totalorder %s179, %s195
    %p197 = scmp.eq.s32.totalorder %s19, 0
    %p198 = por %p196, %p197
    %p199 = scmp.le.s32.totalorder 1, %s13
    %p200 = scmp.lt.s32.totalorder %s13, 3
    %p201 = pnand %p199, %p200
    %p202 = pneg %p201
    // Predicated region
    $region9: #{basic_residual_unit.1} parent=5 // pred_check
      _
    $region10: #{basic_residual_unit.1} parent=5 // pred_check_branch
      %204 = sbr.rel (%p201) target = $region12
    $region11: #{basic_residual_unit.1} parent=5 // pred_region
      %s205 = ssub.s32 %s13, 1
      // Predicated region
      $region13: #{basic_residual_unit.1} parent=11 // pred_check
        %p206 = pneg %p60
      $region14: #{basic_residual_unit.1} parent=11 // pred_check_branch
        %208 = sbr.rel (%p206) target = $region16
      $region15: #{basic_residual_unit.1} parent=11 // pred_region
        _
      $region16: #{basic_residual_unit.1} parent=11 // pred_fallthru
        _
      // Predicated region
      $region17: #{basic_residual_unit.1} parent=11 // pred_check
        %p209 = pneg %p81
      $region18: #{basic_residual_unit.1} parent=11 // pred_check_branch
        %211 = sbr.rel (%p209) target = $region20
      $region19: #{basic_residual_unit.1} parent=11 // pred_region
        _
      $region20: #{basic_residual_unit.1} parent=11 // pred_fallthru
        _
      // Predicated region
      $region21: #{basic_residual_unit.1} parent=11 // pred_check
        %p212 = pneg %p102
      $region22: #{basic_residual_unit.1} parent=11 // pred_check_branch
        %214 = sbr.rel (%p212) target = $region24
      $region23: #{basic_residual_unit.1} parent=11 // pred_region
        _
      $region24: #{basic_residual_unit.1} parent=11 // pred_fallthru
        _
      // Predicated region
      $region25: #{basic_residual_unit.1} parent=11 // pred_check
        %p215 = pneg %p123
      $region26: #{basic_residual_unit.1} parent=11 // pred_check_branch
        %217 = sbr.rel (%p215) target = $region28
      $region27: #{basic_residual_unit.1} parent=11 // pred_region
        _
      $region28: #{basic_residual_unit.1} parent=11 // pred_fallthru
        _
      // Predicated region
      $region29: #{basic_residual_unit.1} parent=11 // pred_check
        %p218 = pneg %p144
      $region30: #{basic_residual_unit.1} parent=11 // pred_check_branch
        %220 = sbr.rel (%p218) target = $region32
      $region31: #{basic_residual_unit.1} parent=11 // pred_region
        _
      $region32: #{basic_residual_unit.1} parent=11 // pred_fallthru
        _
      // Predicated region
      $region33: #{basic_residual_unit.1} parent=11 // pred_check
        %p221 = pneg %p165
      $region34: #{basic_residual_unit.1} parent=11 // pred_check_branch
        %223 = sbr.rel (%p221) target = $region36
      $region35: #{basic_residual_unit.1} parent=11 // pred_region
        _
      $region36: #{basic_residual_unit.1} parent=11 // pred_fallthru
        _
    $region12: #{basic_residual_unit.1} parent=5 // pred_fallthru
      _
    %p224 = scmp.lt.s32.totalorder %s13, 2
    // Predicated region
    $region37: #{basic_residual_unit.1} parent=5 // pred_check
      %p225 = pneg %p224
    $region38: #{basic_residual_unit.1} parent=5 // pred_check_branch
      %227 = sbr.rel (%p225) target = $region40
    $region39: #{basic_residual_unit.1} parent=5 // pred_region
      // Predicated region
      $region41: #{basic_residual_unit.1} parent=39 // pred_check
        %p228 = pneg %p33
      $region42: #{basic_residual_unit.1} parent=39 // pred_check_branch
        %230 = sbr.rel (%p228) target = $region44
      $region43: #{basic_residual_unit.1} parent=39 // pred_region
        %p231 = scmp.lt.s32.totalorder %s13, 1
        %s232 = scalar_select %p231, %s13, 1
        %s233 = smul.addr %s232, 4
        %s234 = smul.addr %s233, 8
        %s235 = scalar_lea.vmem %s0, %s234
      $region44: #{basic_residual_unit.1} parent=39 // pred_fallthru
        _
    $region40: #{basic_residual_unit.1} parent=5 // pred_fallthru
      _
    %p236 = scmp.le.s32.totalorder 1, %s13
    %p237 = scmp.lt.s32.totalorder %s13, 3
    %p238 = pnand %p236, %p237
    %p239 = pneg %p238
    // Predicated region
    $region45: #{basic_residual_unit.1} parent=5 // pred_check
      _
    $region46: #{basic_residual_unit.1} parent=5 // pred_check_branch
      %241 = sbr.rel (%p238) target = $region48
    $region47: #{basic_residual_unit.1} parent=5 // pred_region
      %s242 = ssub.s32 %s13, 1
      %p243 = scmp.lt.s32.totalorder %s18, 1
      %s244 = scalar_select %p243, %s18, 1
      %s245 = smul.addr %s244, 4
      %s246 = smul.addr %s245, 8
      %s247 = scalar_lea.vmem %s0, %s246
      %p248 = pneg %p39
      %p249 = pneg %p36
      %p250 = pneg %p60
      %p251 = pneg %p57
      %p252 = pneg %p81
      %p253 = pneg %p78
      %p254 = pneg %p102
      %p255 = pneg %p99
      %p256 = pneg %p123
      %p257 = pneg %p120
      %p258 = pneg %p144
      %p259 = pneg %p141
      %p260 = pneg %p165
      %p261 = pneg %p162
      %p262 = pneg %p191
      %p263 = pneg %p188
      %p264 = scmp.lt.s32.totalorder %s18, 1
      %s265 = scalar_select %p264, %s18, 1
      %s266 = smul.addr %s265, 4
      %s267 = smul.addr %s266, 8
      %s268 = scalar_lea.vmem %s7, %s267
      %p269 = scmp.lt.s32.totalorder %s18, 1
      %s270 = scalar_select %p269, %s18, 1
      %s271 = smul.addr %s270, 4
      %s272 = smul.addr %s271, 8
      %s273 = scalar_lea.vmem %s0, %s272
      %p274 = scmp.lt.s32.totalorder %s18, 1
      %s275 = scalar_select %p274, %s18, 1
      %s276 = smul.addr %s275, 4
      %s277 = smul.addr %s276, 8
      %s278 = scalar_lea.vmem %s7, %s277
      %vm279 = vcmask 130048
      %280 = vst.msk [vmem:[#allocation2] sm:$0xff] %vm279, 0.0
      %281 = vst.msk [vmem:[#allocation2 + $0x8] sm:$0xff] %vm279, 0.0
      %282 = vst.msk [vmem:[#allocation2 + $0x10] sm:$0xff] %vm279, 0.0
      %283 = vst.msk [vmem:[#allocation2 + $0x18] sm:$0xff] %vm279, 0.0
      %vm284 = vcmask 125952
      %285 = vst.msk [vmem:[#allocation2 + $0x20] sm:$0xf] %vm284, 0.0
      %v286 = vld [vmem:[%s273] sm:$0xff]
      %v287 = vld [vmem:[%s273 + $0x8] sm:$0xff]
      %v288 = vld [vmem:[%s273 + $0x10] sm:$0xff]
      %v289 = vld [vmem:[%s273 + $0x18] sm:$0xff]
      %290 = vst.msk [vmem:[#allocation2 + $0x2] sm:$0xff] %vm279, %v286
      %291 = vst.msk [vmem:[#allocation2 + $0xa] sm:$0xff] %vm279, %v287
      %292 = vst.msk [vmem:[#allocation2 + $0x12] sm:$0xff] %vm279, %v288
      %293 = vst.msk [vmem:[#allocation2 + $0x1a] sm:$0xff] %vm279, %v289
      %v294 = vld [vmem:[#allocation2] sm:$0xff]
      %v295 = vld [vmem:[#allocation2 + $0x8] sm:$0xff]
      %v296 = vld [vmem:[#allocation2 + $0x10] sm:$0xff]
      %v297 = vld [vmem:[#allocation2 + $0x18] sm:$0xff]
      %v298 = vld [vmem:[#allocation2 + $0x20] sm:$0xf]
      %vm304 = vcmask 1046528
      %v305 = vrot.slane %v294, 1
      %v306 = vrot.slane %v295, 1
      %v307 = vsel %vm304, %v305, %v306
      %v308 = vrot.slane %v296, 1
      %v309 = vsel %vm304, %v306, %v308
      %v310 = vrot.slane %v297, 1
      %v311 = vsel %vm304, %v308, %v310
      %v312 = vrot.slane %v298, 1
      %v313 = vsel %vm304, %v310, %v312
      %314 = vrot.lane.b32.xlu0 %v307, 16
      %v315 = vpop.permute.xlu0 %314
      %316 = vrot.lane.b32.xlu0 %v309, 16
      %v317 = vpop.permute.xlu0 %316
      %318 = vrot.lane.b32.xlu0 %v311, 16
      %v319 = vpop.permute.xlu0 %318
      %320 = vrot.lane.b32.xlu0 %v313, 16
      %v321 = vpop.permute.xlu0 %320
      %vm326 = vcmask 1045504
      %v327 = vrot.slane %v294, 2
      %v328 = vrot.slane %v295, 2
      %v329 = vsel %vm326, %v327, %v328
      %v330 = vrot.slane %v296, 2
      %v331 = vsel %vm326, %v328, %v330
      %v332 = vrot.slane %v297, 2
      %v333 = vsel %vm326, %v330, %v332
      %v334 = vrot.slane %v298, 2
      %v335 = vsel %vm326, %v332, %v334
      %336 = vrot.lane.b32.xlu0 %v329, 32
      %v337 = vpop.permute.xlu0 %336
      %338 = vrot.lane.b32.xlu0 %v331, 32
      %v339 = vpop.permute.xlu0 %338
      %340 = vrot.lane.b32.xlu0 %v333, 32
      %v341 = vpop.permute.xlu0 %340
      %342 = vrot.lane.b32.xlu0 %v335, 32
      %v343 = vpop.permute.xlu0 %342
      %vm348 = vcmask 1044480
      %v349 = vrot.slane %v294, 3
      %v350 = vrot.slane %v295, 3
      %v351 = vsel %vm348, %v349, %v350
      %v352 = vrot.slane %v296, 3
      %v353 = vsel %vm348, %v350, %v352
      %v354 = vrot.slane %v297, 3
      %v355 = vsel %vm348, %v352, %v354
      %v356 = vrot.slane %v298, 3
      %v357 = vsel %vm348, %v354, %v356
      %358 = vrot.lane.b32.xlu0 %v351, 48
      %v359 = vpop.permute.xlu0 %358
      %360 = vrot.lane.b32.xlu0 %v353, 48
      %v361 = vpop.permute.xlu0 %360
      %362 = vrot.lane.b32.xlu0 %v355, 48
      %v363 = vpop.permute.xlu0 %362
      %364 = vrot.lane.b32.xlu0 %v357, 48
      %v365 = vpop.permute.xlu0 %364
      %vm370 = vcmask 1043456
      %v371 = vrot.slane %v294, 4
      %v372 = vrot.slane %v295, 4
      %v373 = vsel %vm370, %v371, %v372
      %v374 = vrot.slane %v296, 4
      %v375 = vsel %vm370, %v372, %v374
      %v376 = vrot.slane %v297, 4
      %v377 = vsel %vm370, %v374, %v376
      %v378 = vrot.slane %v298, 4
      %v379 = vsel %vm370, %v376, %v378
      %380 = vrot.lane.b32.xlu0 %v373, 64
      %v381 = vpop.permute.xlu0 %380
      %382 = vrot.lane.b32.xlu0 %v375, 64
      %v383 = vpop.permute.xlu0 %382
      %384 = vrot.lane.b32.xlu0 %v377, 64
      %v385 = vpop.permute.xlu0 %384
      %386 = vrot.lane.b32.xlu0 %v379, 64
      %v387 = vpop.permute.xlu0 %386
      %v392 = vsel %vm279, %v294, %v315
      %v393 = vsel %vm279, %v295, %v317
      %v394 = vsel %vm279, %v296, %v319
      %v395 = vsel %vm279, %v297, %v321
      %vm396 = vcmask 261120
      %v397 = vsel %vm396, %v392, %v337
      %v398 = vsel %vm396, %v393, %v339
      %v399 = vsel %vm396, %v394, %v341
      %v400 = vsel %vm396, %v395, %v343
      %vm401 = vcmask 392192
      %v402 = vsel %vm401, %v397, %v359
      %v403 = vsel %vm401, %v398, %v361
      %v404 = vsel %vm401, %v399, %v363
      %v405 = vsel %vm401, %v400, %v365
      %vm406 = vcmask 523264
      %v407 = vsel %vm406, %v402, %v381
      %v408 = vsel %vm406, %v403, %v383
      %v409 = vsel %vm406, %v404, %v385
      %v410 = vsel %vm406, %v405, %v387
      %v411 = vld [vmem:[%s1] sm:$0xff]
      %v412 = vld [vmem:[%s1 + $0x8] sm:$0xff]
      %v413 = vld [vmem:[%s1 + $0x10] sm:$0xff]
      %v414 = vld [vmem:[%s1 + $0x18] sm:$0xff]
      %v415 = vld [vmem:[%s1 + $0x20] sm:$0xff]
      %v416 = vld [vmem:[%s1 + $0x28] sm:$0xff]
      %v417 = vld [vmem:[%s1 + $0x30] sm:$0xff]
      %v418 = vld [vmem:[%s1 + $0x38] sm:$0xff]
      %v419 = vld [vmem:[%s1 + $0x40] sm:$0xff]
      %v420 = vld [vmem:[%s1 + $0x48] sm:$0xff]
      %vm421 = vcmask 654336
      %v423 = vsel %vm421, %v407, 0
      %v426 = vsel %vm421, %v408, 0
      %v429 = vsel %vm421, %v409, 0
      %v432 = vsel %vm421, %v410, 0
      %434 = vmatprep.subr.mxu0 0.0
      %435 = vmatpush1.msra.mxu0 %v411
      %436 = vmatprep.subr.mxu0 0.0
      %437 = vmatpush1.msra.mxu0 %v412
      %438 = vmatprep.subr.mxu0 0.0
      %439 = vmatpush1.msra.mxu0 %v413
      %440 = vmatprep.subr.mxu0 0.0
      %441 = vmatpush1.msra.mxu0 %v414
      %442 = vmatprep.subr.mxu0 0.0
      %443 = vmatpush1.msra.mxu0 %v415
      %444 = vmatprep.subr.mxu0 0.0
      %445 = vmatpush1.msra.mxu0 %v416
      %446 = vmatprep.subr.mxu0 0.0
      %447 = vmatpush1.msra.mxu0 %v417
      %448 = vmatprep.subr.mxu0 0.0
      %449 = vmatpush1.msra.mxu0 %v418
      %450 = vmatprep.subr.mxu0 0.0
      %451 = vmatpush1.msra.mxu0 %v419
      %452 = vmatprep.subr.mxu0 0.0
      %453 = vmatpush1.msra.mxu0 %v420
      %454 = vmatprep.subr.mxu0 0.0
      %455 = vmatpush1.msra.mxu0 0.0
      %456 = vmatprep.subr.mxu0 0.0
      %457 = vmatpush1.msra.mxu0 0.0
      %458 = vmatprep.subr.mxu0 0.0
      %459 = vmatpush1.msra.mxu0 0.0
      %460 = vmatprep.subr.mxu0 0.0
      %461 = vmatpush1.msra.mxu0 0.0
      %462 = vmatprep.subr.mxu0 0.0
      %463 = vmatpush1.msra.mxu0 0.0
      %464 = vmatprep.subr.mxu0 0.0
      %465 = vmatpush1.msra.mxu0 0.0
      %466 = vmatprep.subr.mxu0 0.0
      %467 = vmatpush1.msra.mxu0 0.0
      %468 = vmatprep.subr.mxu0 0.0
      %469 = vmatpush1.msra.mxu0 0.0
      %470 = vmatprep.subr.mxu0 0.0
      %471 = vmatpush1.msra.mxu0 0.0
      %472 = vmatprep.subr.mxu0 0.0
      %473 = vmatpush1.msra.mxu0 0.0
      %474 = vmatprep.subr.mxu0 0.0
      %475 = vmatpush1.msra.mxu0 0.0
      %476 = vmatprep.subr.mxu0 0.0
      %477 = vmatpush1.msra.mxu0 0.0
      %478 = vmatprep.subr.mxu0 0.0
      %479 = vmatpush1.msra.mxu0 0.0
      %480 = vmatprep.subr.mxu0 0.0
      %481 = vmatpush1.msra.mxu0 0.0
      %482 = vmatprep.subr.mxu0 0.0
      %483 = vmatpush1.msra.mxu0 0.0
      %484 = vmatprep.subr.mxu0 0.0
      %485 = vmatpush1.msra.mxu0 0.0
      %486 = vmatprep.subr.mxu0 0.0
      %487 = vmatpush1.msra.mxu0 0.0
      %488 = vmatprep.subr.mxu0 0.0
      %489 = vmatpush1.msra.mxu0 0.0
      %490 = vmatprep.subr.mxu0 0.0
      %491 = vmatpush1.msra.mxu0 0.0
      %492 = vmatprep.subr.mxu0 0.0
      %493 = vmatpush1.msra.mxu0 0.0
      %494 = vmatprep.subr.mxu0 0.0
      %495 = vmatpush1.msra.mxu0 0.0
      %496 = vmatprep.subr.mxu0 0.0
      %497 = vmatpush1.msra.mxu0 0.0
      %498 = vmatprep.mubr.f32.mxu0 0.0
      %499 = vmatmul.mubr.f32.gmra.mrb[0].mxu0 %v423
      %v500 = vpop.f32.mrb[0].mxu0
      %v501 = vadd.f32 0.0, %v500
      %v502 = vpop.f32.mrb[0].mxu0
      %503 = vmatprep.mubr.f32.mxu0 0.0
      %504 = vmatmul.mubr.f32.gmra.mrb[0].mxu0 %v426
      %v505 = vpop.f32.mrb[0].mxu0
      %v506 = vadd.f32 0.0, %v505
      %v507 = vpop.f32.mrb[0].mxu0
      %508 = vmatprep.mubr.f32.mxu0 0.0
      %509 = vmatmul.mubr.f32.gmra.mrb[0].mxu0 %v429
      %v510 = vpop.f32.mrb[0].mxu0
      %v511 = vadd.f32 0.0, %v510
      %v512 = vpop.f32.mrb[0].mxu0
      %513 = vmatprep.mubr.f32.mxu0 0.0
      %514 = vmatmul.mubr.f32.gmra.mrb[0].mxu0 %v432
      %v515 = vpop.f32.mrb[0].mxu0
      %v516 = vadd.f32 0.0, %v515
      %v517 = vpop.f32.mrb[0].mxu0
      %518 = vdwg.mxu0
      %v519 = vld [vmem:[%s2] sm:$0x1]
      %v521 = vlaneseq
      %v522 = vshrl.u32 %v521, 7
      %v523 = vsub.s32 0, %v522
      %v524 = vrot.slane %v519, %v523
      %v526 = vmul.f32 %v501, %v524
      %v527 = vmul.f32 %v506, %v524
      %v528 = vmul.f32 %v511, %v524
      %v529 = vmul.f32 %v516, %v524
      %v530 = vld [vmem:[%s3] sm:$0x1]
      %v532 = vlaneseq
      %v533 = vshrl.u32 %v532, 7
      %v534 = vsub.s32 0, %v533
      %v535 = vrot.slane %v530, %v534
      %v537 = vadd.f32 %v526, %v535
      %v538 = vadd.f32 %v527, %v535
      %v539 = vadd.f32 %v528, %v535
      %v540 = vadd.f32 %v529, %v535
      %v541 = vmax.f32 %v537, 0.0
      %v542 = vmax.f32 %v538, 0.0
      %v543 = vmax.f32 %v539, 0.0
      %v544 = vmax.f32 %v540, 0.0
      %545 = vst.msk [vmem:[#allocation2 + $0x2] sm:$0xff] %vm279, %v541
      %546 = vst.msk [vmem:[#allocation2 + $0xa] sm:$0xff] %vm279, %v542
      %547 = vst.msk [vmem:[#allocation2 + $0x12] sm:$0xff] %vm279, %v543
      %548 = vst.msk [vmem:[#allocation2 + $0x1a] sm:$0xff] %vm279, %v544
      %v549 = vld [vmem:[#allocation2] sm:$0xff]
      %v550 = vld [vmem:[#allocation2 + $0x8] sm:$0xff]
      %v551 = vld [vmem:[#allocation2 + $0x10] sm:$0xff]
      %v552 = vld [vmem:[#allocation2 + $0x18] sm:$0xff]
      %v553 = vld [vmem:[#allocation2 + $0x20] sm:$0xf]
      %v559 = vrot.slane %v549, 1
      %v560 = vrot.slane %v550, 1
      %v561 = vsel %vm304, %v559, %v560
      %v562 = vrot.slane %v551, 1
      %v563 = vsel %vm304, %v560, %v562
      %v564 = vrot.slane %v552, 1
      %v565 = vsel %vm304, %v562, %v564
      %v566 = vrot.slane %v553, 1
      %v567 = vsel %vm304, %v564, %v566
      %568 = vrot.lane.b32.xlu0 %v561, 16
      %v569 = vpop.permute.xlu0 %568
      %570 = vrot.lane.b32.xlu0 %v563, 16
      %v571 = vpop.permute.xlu0 %570
      %572 = vrot.lane.b32.xlu0 %v565, 16
      %v573 = vpop.permute.xlu0 %572
      %574 = vrot.lane.b32.xlu0 %v567, 16
      %v575 = vpop.permute.xlu0 %574
      %v580 = vrot.slane %v549, 2
      %v581 = vrot.slane %v550, 2
      %v582 = vsel %vm326, %v580, %v581
      %v583 = vrot.slane %v551, 2
      %v584 = vsel %vm326, %v581, %v583
      %v585 = vrot.slane %v552, 2
      %v586 = vsel %vm326, %v583, %v585
      %v587 = vrot.slane %v553, 2
      %v588 = vsel %vm326, %v585, %v587
      %589 = vrot.lane.b32.xlu0 %v582, 32
      %v590 = vpop.permute.xlu0 %589
      %591 = vrot.lane.b32.xlu0 %v584, 32
      %v592 = vpop.permute.xlu0 %591
      %593 = vrot.lane.b32.xlu0 %v586, 32
      %v594 = vpop.permute.xlu0 %593
      %595 = vrot.lane.b32.xlu0 %v588, 32
      %v596 = vpop.permute.xlu0 %595
      %v601 = vrot.slane %v549, 3
      %v602 = vrot.slane %v550, 3
      %v603 = vsel %vm348, %v601, %v602
      %v604 = vrot.slane %v551, 3
      %v605 = vsel %vm348, %v602, %v604
      %v606 = vrot.slane %v552, 3
      %v607 = vsel %vm348, %v604, %v606
      %v608 = vrot.slane %v553, 3
      %v609 = vsel %vm348, %v606, %v608
      %610 = vrot.lane.b32.xlu0 %v603, 48
      %v611 = vpop.permute.xlu0 %610
      %612 = vrot.lane.b32.xlu0 %v605, 48
      %v613 = vpop.permute.xlu0 %612
      %614 = vrot.lane.b32.xlu0 %v607, 48
      %v615 = vpop.permute.xlu0 %614
      %616 = vrot.lane.b32.xlu0 %v609, 48
      %v617 = vpop.permute.xlu0 %616
      %v622 = vrot.slane %v549, 4
      %v623 = vrot.slane %v550, 4
      %v624 = vsel %vm370, %v622, %v623
      %v625 = vrot.slane %v551, 4
      %v626 = vsel %vm370, %v623, %v625
      %v627 = vrot.slane %v552, 4
      %v628 = vsel %vm370, %v625, %v627
      %v629 = vrot.slane %v553, 4
      %v630 = vsel %vm370, %v627, %v629
      %631 = vrot.lane.b32.xlu0 %v624, 64
      %v632 = vpop.permute.xlu0 %631
      %633 = vrot.lane.b32.xlu0 %v626, 64
      %v634 = vpop.permute.xlu0 %633
      %635 = vrot.lane.b32.xlu0 %v628, 64
      %v636 = vpop.permute.xlu0 %635
      %637 = vrot.lane.b32.xlu0 %v630, 64
      %v638 = vpop.permute.xlu0 %637
      %v643 = vsel %vm279, %v549, %v569
      %v644 = vsel %vm279, %v550, %v571
      %v645 = vsel %vm279, %v551, %v573
      %v646 = vsel %vm279, %v552, %v575
      %v647 = vsel %vm396, %v643, %v590
      %v648 = vsel %vm396, %v644, %v592
      %v649 = vsel %vm396, %v645, %v594
      %v650 = vsel %vm396, %v646, %v596
      %v651 = vsel %vm401, %v647, %v611
      %v652 = vsel %vm401, %v648, %v613
      %v653 = vsel %vm401, %v649, %v615
      %v654 = vsel %vm401, %v650, %v617
      %v655 = vsel %vm406, %v651, %v632
      %v656 = vsel %vm406, %v652, %v634
      %v657 = vsel %vm406, %v653, %v636
      %v658 = vsel %vm406, %v654, %v638
      %v659 = vld [vmem:[%s4] sm:$0xff]
      %v660 = vld [vmem:[%s4 + $0x8] sm:$0xff]
      %v661 = vld [vmem:[%s4 + $0x10] sm:$0xff]
      %v662 = vld [vmem:[%s4 + $0x18] sm:$0xff]
      %v663 = vld [vmem:[%s4 + $0x20] sm:$0xff]
      %v664 = vld [vmem:[%s4 + $0x28] sm:$0xff]
      %v665 = vld [vmem:[%s4 + $0x30] sm:$0xff]
      %v666 = vld [vmem:[%s4 + $0x38] sm:$0xff]
      %v667 = vld [vmem:[%s4 + $0x40] sm:$0xff]
      %v668 = vld [vmem:[%s4 + $0x48] sm:$0xff]
      %v670 = vsel %vm421, %v655, 0
      %v673 = vsel %vm421, %v656, 0
      %v676 = vsel %vm421, %v657, 0
      %v679 = vsel %vm421, %v658, 0
      %681 = vmatprep.subr.mxu0 0.0
      %682 = vmatpush1.msra.mxu0 %v659
      %683 = vmatprep.subr.mxu0 0.0
      %684 = vmatpush1.msra.mxu0 %v660
      %685 = vmatprep.subr.mxu0 0.0
      %686 = vmatpush1.msra.mxu0 %v661
      %687 = vmatprep.subr.mxu0 0.0
      %688 = vmatpush1.msra.mxu0 %v662
      %689 = vmatprep.subr.mxu0 0.0
      %690 = vmatpush1.msra.mxu0 %v663
      %691 = vmatprep.subr.mxu0 0.0
      %692 = vmatpush1.msra.mxu0 %v664
      %693 = vmatprep.subr.mxu0 0.0
      %694 = vmatpush1.msra.mxu0 %v665
      %695 = vmatprep.subr.mxu0 0.0
      %696 = vmatpush1.msra.mxu0 %v666
      %697 = vmatprep.subr.mxu0 0.0
      %698 = vmatpush1.msra.mxu0 %v667
      %699 = vmatprep.subr.mxu0 0.0
      %700 = vmatpush1.msra.mxu0 %v668
      %701 = vmatprep.subr.mxu0 0.0
      %702 = vmatpush1.msra.mxu0 0.0
      %703 = vmatprep.subr.mxu0 0.0
      %704 = vmatpush1.msra.mxu0 0.0
      %705 = vmatprep.subr.mxu0 0.0
      %706 = vmatpush1.msra.mxu0 0.0
      %707 = vmatprep.subr.mxu0 0.0
      %708 = vmatpush1.msra.mxu0 0.0
      %709 = vmatprep.subr.mxu0 0.0
      %710 = vmatpush1.msra.mxu0 0.0
      %711 = vmatprep.subr.mxu0 0.0
      %712 = vmatpush1.msra.mxu0 0.0
      %713 = vmatprep.subr.mxu0 0.0
      %714 = vmatpush1.msra.mxu0 0.0
      %715 = vmatprep.subr.mxu0 0.0
      %716 = vmatpush1.msra.mxu0 0.0
      %717 = vmatprep.subr.mxu0 0.0
      %718 = vmatpush1.msra.mxu0 0.0
      %719 = vmatprep.subr.mxu0 0.0
      %720 = vmatpush1.msra.mxu0 0.0
      %721 = vmatprep.subr.mxu0 0.0
      %722 = vmatpush1.msra.mxu0 0.0
      %723 = vmatprep.subr.mxu0 0.0
      %724 = vmatpush1.msra.mxu0 0.0
      %725 = vmatprep.subr.mxu0 0.0
      %726 = vmatpush1.msra.mxu0 0.0
      %727 = vmatprep.subr.mxu0 0.0
      %728 = vmatpush1.msra.mxu0 0.0
      %729 = vmatprep.subr.mxu0 0.0
      %730 = vmatpush1.msra.mxu0 0.0
      %731 = vmatprep.subr.mxu0 0.0
      %732 = vmatpush1.msra.mxu0 0.0
      %733 = vmatprep.subr.mxu0 0.0
      %734 = vmatpush1.msra.mxu0 0.0
      %735 = vmatprep.subr.mxu0 0.0
      %736 = vmatpush1.msra.mxu0 0.0
      %737 = vmatprep.subr.mxu0 0.0
      %738 = vmatpush1.msra.mxu0 0.0
      %739 = vmatprep.subr.mxu0 0.0
      %740 = vmatpush1.msra.mxu0 0.0
      %741 = vmatprep.subr.mxu0 0.0
      %742 = vmatpush1.msra.mxu0 0.0
      %743 = vmatprep.subr.mxu0 0.0
      %744 = vmatpush1.msra.mxu0 0.0
      %745 = vmatprep.mubr.f32.mxu0 0.0
      %746 = vmatmul.mubr.f32.gmra.mrb[0].mxu0 %v670
      %v747 = vpop.f32.mrb[0].mxu0
      %v748 = vadd.f32 0.0, %v747
      %v749 = vpop.f32.mrb[0].mxu0
      %750 = vmatprep.mubr.f32.mxu0 0.0
      %751 = vmatmul.mubr.f32.gmra.mrb[0].mxu0 %v673
      %v752 = vpop.f32.mrb[0].mxu0
      %v753 = vadd.f32 0.0, %v752
      %v754 = vpop.f32.mrb[0].mxu0
      %755 = vmatprep.mubr.f32.mxu0 0.0
      %756 = vmatmul.mubr.f32.gmra.mrb[0].mxu0 %v676
      %v757 = vpop.f32.mrb[0].mxu0
      %v758 = vadd.f32 0.0, %v757
      %v759 = vpop.f32.mrb[0].mxu0
      %760 = vmatprep.mubr.f32.mxu0 0.0
      %761 = vmatmul.mubr.f32.gmra.mrb[0].mxu0 %v679
      %v762 = vpop.f32.mrb[0].mxu0
      %v763 = vadd.f32 0.0, %v762
      %v764 = vpop.f32.mrb[0].mxu0
      %765 = vdwg.mxu0
      %v766 = vld [vmem:[%s5] sm:$0x1]
      %v768 = vlaneseq
      %v769 = vshrl.u32 %v768, 7
      %v770 = vsub.s32 0, %v769
      %v771 = vrot.slane %v766, %v770
      %v773 = vmul.f32 %v748, %v771
      %v774 = vmul.f32 %v753, %v771
      %v775 = vmul.f32 %v758, %v771
      %v776 = vmul.f32 %v763, %v771
      %v777 = vld [vmem:[%s6] sm:$0x1]
      %v779 = vlaneseq
      %v780 = vshrl.u32 %v779, 7
      %v781 = vsub.s32 0, %v780
      %v782 = vrot.slane %v777, %v781
      %v784 = vadd.f32 %v773, %v782
      %v785 = vadd.f32 %v774, %v782
      %v786 = vadd.f32 %v775, %v782
      %v787 = vadd.f32 %v776, %v782
      %v788 = vadd.f32 %v784, %v286
      %v789 = vadd.f32 %v785, %v287
      %v790 = vadd.f32 %v786, %v288
      %v791 = vadd.f32 %v787, %v289
      %792 = vst.msk [vmem:[%s278] sm:$0xff] %vm279, %v788
      %793 = vst.msk [vmem:[%s278 + $0x8] sm:$0xff] %vm279, %v789
      %794 = vst.msk [vmem:[%s278 + $0x10] sm:$0xff] %vm279, %v790
      %795 = vst.msk [vmem:[%s278 + $0x18] sm:$0xff] %vm279, %v791
      %p796 = scmp.lt.s32.totalorder %s18, 1
      %s797 = scalar_select %p796, %s18, 1
      %s798 = smul.addr %s797, 4
      %s799 = smul.addr %s798, 8
      %s800 = scalar_lea.vmem %s7, %s799
      // Predicated region
      $region49: #{basic_residual_unit.1} parent=47 // pred_check
        %p801 = pneg %p188
      $region50: #{basic_residual_unit.1} parent=47 // pred_check_branch
        %803 = sbr.rel (%p801) target = $region52
      $region51: #{basic_residual_unit.1} parent=47 // pred_region
        _
      $region52: #{basic_residual_unit.1} parent=47 // pred_fallthru
        _
    $region48: #{basic_residual_unit.1} parent=5 // pred_fallthru
      _
    %p804 = scmp.le.s32.totalorder 2, %s13
    // Predicated region
    $region53: #{basic_residual_unit.1} parent=5 // pred_check
      %p805 = pneg %p804
    $region54: #{basic_residual_unit.1} parent=5 // pred_check_branch
      %807 = sbr.rel (%p805) target = $region56
    $region55: #{basic_residual_unit.1} parent=5 // pred_region
      %s808 = ssub.s32 %s13, 2
      // Predicated region
      $region57: #{basic_residual_unit.1} parent=55 // pred_check
        %p809 = pneg %p194
      $region58: #{basic_residual_unit.1} parent=55 // pred_check_branch
        %811 = sbr.rel (%p809) target = $region60
      $region59: #{basic_residual_unit.1} parent=55 // pred_region
        %p812 = scmp.lt.s32.totalorder %s19, 1
        %s813 = scalar_select %p812, %s19, 1
        %s814 = smul.addr %s813, 4
        %s815 = smul.addr %s814, 8
        %s816 = scalar_lea.vmem %s7, %s815
      $region60: #{basic_residual_unit.1} parent=55 // pred_fallthru
        _
    $region56: #{basic_residual_unit.1} parent=5 // pred_fallthru
      _
  $region6: #{basic_residual_unit.1} parent=0 // loop_footer
    %s17 = sadd.s32 1, %s13
  $region7: #{basic_residual_unit.1} parent=0 // loop_footer_branch
    %12 = sbr.rel target = $region3
  $region8: #{basic_residual_unit.1} parent=0 // loop_exit
    _

</llo_original>
